<compile_context>
chip_gen: v5e
topology: v5e:2x2
jax: 0.10.0
libtpu: 0.0.40
codegen_flags: <defaults>
</compile_context>

<pallas_src>
import jax
import jax.numpy as jnp
from jax.experimental import pallas as pl
from jax.experimental.pallas import tpu as pltpu

_INV_SQRT2 = 0.7071067811865476


def _gelu_exact(x):
    # nn.GELU default: 0.5 * x * (1 + erf(x / sqrt(2))), computed in f32.
    # TODO(synk): jax.nn.gelu(approximate=True) (tanh -> EUP) is cheaper but is a
    # (small) numerics deviation from the PyTorch module default, so not enabled.
    return 0.5 * x * (1.0 + jax.lax.erf(x * _INV_SQRT2))


def _round_up(n, m):
    return (n + m - 1) // m * m


def _cdiv(a, b):
    return (a + b - 1) // b


def mlp_kernel(x_ref, w1_ref, b1_ref, w2_ref, b2_ref, o_ref, acc_ref):
    k = pl.program_id(1)

    @pl.when(k == 0)
    def _():
        acc_ref[...] = jnp.zeros_like(acc_ref)

    # fc1 (one hidden tile): bf16 operands, f32 accumulation on the MXU.
    x_bf = x_ref[...].astype(w1_ref.dtype)           # in-kernel cast (no HBM copy)
    h = jnp.dot(x_bf, w1_ref[...], preferred_element_type=jnp.float32)
    h = h + b1_ref[...]                               # (1, tk_h) broadcast, f32
    h = _gelu_exact(h)                                # f32 elementwise
    # TODO(synk): dropout (p=0.0) is identity in this config; no RNG path emitted.

    # fc2 partial product for this hidden tile, accumulated in f32 scratch.
    acc_ref[...] += jnp.dot(h.astype(w2_ref.dtype), w2_ref[...],
                            preferred_element_type=jnp.float32)

    @pl.when(k == pl.num_programs(1) - 1)
    def _():
        o_ref[...] = (acc_ref[...] + b2_ref[...]).astype(o_ref.dtype)


def prepare_mlp_params(w1, b1, w2, b2, compute_dtype=jnp.bfloat16):
    """One-time parameter prep: pad hidden dim to a 128 multiple, cast to bf16.

    Padded hidden columns/rows are zero so they contribute nothing
    (GELU(0 + 0) = 0 and the corresponding W2 rows are zero).
    """
    D_in, H = w1.shape
    H2, D_out = w2.shape
    assert H2 == H and b1.shape == (H,) and b2.shape == (D_out,)
    H_p = _round_up(H, 128)
    w1p = jnp.zeros((D_in, H_p), compute_dtype).at[:, :H].set(w1.astype(compute_dtype))
    b1p = jnp.zeros((1, H_p), jnp.float32).at[0, :H].set(b1.astype(jnp.float32))
    w2p = jnp.zeros((H_p, D_out), compute_dtype).at[:H, :].set(w2.astype(compute_dtype))
    b2p = b2.astype(jnp.float32).reshape(1, D_out)
    return w1p, b1p, w2p, b2p


def _vmem_bytes(tm, d_in, tk_h, d_out, x_bytes, c_bytes, o_bytes):
    return (2 * tm * d_in * x_bytes            # x tiles (double-buffered)
            + 2 * d_in * tk_h * c_bytes        # w1 tiles
            + 2 * tk_h * d_out * c_bytes       # w2 tiles
            + 2 * tk_h * 4 + 2 * d_out * 4     # biases
            + 2 * tm * d_out * o_bytes         # out tiles
            + tm * d_out * 4                   # f32 accumulator scratch
            + tm * tk_h * 4)                   # f32 hidden intermediate


def _tpu_vmem_capacity():
    try:
        return int(pltpu.get_tpu_info().vmem_capacity_bytes)
    except Exception:
        return 64 << 20   # conservative (v7x per-core) fallback


def mlp_pallas(x, w1p, b1p, w2p, b2p, *, tm=512, h_tile=None, out_dtype=None):
    """x: (T, D_in); (w1p, b1p, w2p, b2p) from prepare_mlp_params (hidden padded)."""
    T, D_in = x.shape
    D_in_w, H_p = w1p.shape
    D_out = w2p.shape[1]
    assert D_in_w == D_in and H_p % 128 == 0
    out_dtype = out_dtype or x.dtype       # bf16 output available for bf16 consumers

    x_bytes = jnp.dtype(x.dtype).itemsize
    c_bytes = jnp.dtype(w1p.dtype).itemsize
    o_bytes = jnp.dtype(out_dtype).itemsize

    vmem_cap = _tpu_vmem_capacity()
    budget = int(0.70 * vmem_cap)

    # Token tile: large by default, shrinks for small T (>=16 rows); tails are
    # handled by Pallas partial blocks (no zero-padded x / output copies).
    tm_eff = max(16, min(_round_up(tm, 16), _round_up(T, 16)))
    n_tok = _cdiv(T, tm_eff)
    # v7x has 2 TensorCores; give the "parallel" axis >= 2 steps for medium T.
    if n_tok < 2 and T >= 256:
        tm_eff = _round_up(_cdiv(T, 2), 16)
        n_tok = _cdiv(T, tm_eff)

    # Hidden (reduction) tile: largest 128-multiple divisor of H_p that fits the
    # VMEM budget.  tk_h == H_p => weights are VMEM-resident and fetched once.
    if h_tile is None:
        cands = [H_p] + [c for c in (2048, 1024, 512, 256, 128)
                         if c < H_p and H_p % c == 0]
        h_tile = 128
        for c in cands:
            if _vmem_bytes(tm_eff, D_in, c, D_out, x_bytes, c_bytes, o_bytes) <= budget:
                h_tile = c
                break
    assert H_p % h_tile == 0 and h_tile % 128 == 0
    n_h = H_p // h_tile

    vmem_needed = _vmem_bytes(tm_eff, D_in, h_tile, D_out, x_bytes, c_bytes, o_bytes)
    vmem_limit = int(min(max(int(1.5 * vmem_needed), 32 << 20), int(0.85 * vmem_cap)))

    cost = pl.CostEstimate(
        flops=2 * T * (D_in * H_p + H_p * D_out),
        transcendentals=T * H_p,
        bytes_accessed=int(T * D_in * x_bytes + T * D_out * o_bytes
                           + n_tok * (D_in * H_p + H_p * D_out) * c_bytes
                           + (H_p + D_out) * 4),
    )

    return pl.pallas_call(
        mlp_kernel,
        out_shape=jax.ShapeDtypeStruct((T, D_out), out_dtype),
        grid_spec=pltpu.PrefetchScalarGridSpec(
            num_scalar_prefetch=0,
            grid=(n_tok, n_h),
            in_specs=[
                pl.BlockSpec((tm_eff, D_in), lambda i, k: (i, 0)),    # x tile
                pl.BlockSpec((D_in, h_tile), lambda i, k: (0, k)),    # w1 tile
                pl.BlockSpec((1, h_tile), lambda i, k: (0, k)),       # b1 tile
                pl.BlockSpec((h_tile, D_out), lambda i, k: (k, 0)),   # w2 tile
                pl.BlockSpec((1, D_out), lambda i, k: (0, 0)),        # b2
            ],
            out_specs=pl.BlockSpec((tm_eff, D_out), lambda i, k: (i, 0)),
            scratch_shapes=[pltpu.VMEM((tm_eff, D_out), jnp.float32)],
        ),
        compiler_params=pltpu.CompilerParams(
            dimension_semantics=("parallel", "arbitrary"),
            vmem_limit_bytes=vmem_limit,
        ),
        cost_estimate=cost,
    )(x, w1p, b1p, w2p, b2p)


def mlp_reference(x, w1, b1, w2, b2, compute_dtype=jnp.bfloat16):
    """Reference with the same bf16-operand / f32-accumulate quantization."""
    xq = x.astype(compute_dtype)
    h = jnp.dot(xq, w1.astype(compute_dtype),
                preferred_element_type=jnp.float32) + b1.astype(jnp.float32)
    h = _gelu_exact(h)
    o = jnp.dot(h.astype(compute_dtype), w2.astype(compute_dtype),
                preferred_element_type=jnp.float32) + b2.astype(jnp.float32)
    return o.astype(x.dtype)


if __name__ == "__main__":
    # Small shapes consistent with the module: batch=2, seq=8, in=32,
    # hidden=512 (module default), out=32.
    batch, seq = 2, 8
    in_features, hidden_features, out_features = 32, 512, 32

    key = jax.random.PRNGKey(0)
    kx, k1, k2, k3, k4 = jax.random.split(key, 5)

    x = jax.random.normal(kx, (batch, seq, in_features), dtype=jnp.float32)

    # Deterministic parameter init (uniform, Linear-like scaling)
    lim1 = 1.0 / float(jnp.sqrt(in_features))
    lim2 = 1.0 / float(jnp.sqrt(hidden_features))
    w1 = jax.random.uniform(k1, (in_features, hidden_features), jnp.float32, -lim1, lim1)
    b1 = jax.random.uniform(k2, (hidden_features,), jnp.float32, -lim1, lim1)
    w2 = jax.random.uniform(k3, (hidden_features, out_features), jnp.float32, -lim2, lim2)
    b2 = jax.random.uniform(k4, (out_features,), jnp.float32, -lim2, lim2)

    # One-time parameter prep (hoisted out of the per-call path).
    params = prepare_mlp_params(w1, b1, w2, b2)
    jax.block_until_ready(params)

    # Flatten tokens for the kernel, restore shape after.
    x2d = x.reshape(batch * seq, in_features)
    out2d = mlp_pallas(x2d, *params)
    out = out2d.reshape(batch, seq, out_features)
    jax.block_until_ready(out)

    # Compare against a reference using the same bf16/f32 mixed precision.
    ref = mlp_reference(x2d, w1, b1, w2, b2).reshape(batch, seq, out_features)
    assert jnp.allclose(out, ref, atol=2e-3, rtol=2e-3), "mismatch vs bf16 reference"

    # Sanity check against the full-f32 math (looser tolerance for bf16 quantization).
    ref_f32 = mlp_reference(x2d, w1, b1, w2, b2, compute_dtype=jnp.float32)
    ref_f32 = ref_f32.reshape(batch, seq, out_features)
    assert jnp.allclose(out, ref_f32, atol=5e-2, rtol=5e-2), "mismatch vs f32 reference"

    # Also exercise the streamed-weight (multi hidden-tile) reduction path.
    out2d_stream = mlp_pallas(x2d, *params, h_tile=128)
    jax.block_until_ready(out2d_stream)
    assert jnp.allclose(out2d_stream.reshape(batch, seq, out_features), ref,
                        atol=2e-3, rtol=2e-3), "mismatch (streamed hidden tiles)"

    print("KERNEL_OK")
</pallas_src>

<mosaic_0001>
module attributes {stable_mosaic.version = 11 : i64} {
  func.func @mlp_kernel(%arg0: i32, %arg1: i32, %arg2: memref<16x32xf32, #tpu.memory_space<vmem>>, %arg3: memref<32x512xbf16, #tpu.memory_space<vmem>>, %arg4: memref<1x512xf32, #tpu.memory_space<vmem>>, %arg5: memref<512x32xbf16, #tpu.memory_space<vmem>>, %arg6: memref<1x32xf32, #tpu.memory_space<vmem>>, %arg7: memref<16x32xf32, #tpu.memory_space<vmem>>, %arg8: memref<16x32xf32, #tpu.memory_space<vmem>>) attributes {dimension_semantics = [#tpu.dimension_semantics<parallel>, #tpu.dimension_semantics<arbitrary>], iteration_bounds = array<i64: 1, 1>, scalar_prefetch = 0 : i64, scratch_operands = 1 : i64, tpu.core_type = #tpu.core_type<tc>, window_params = [{transform_indices = @transform_0, window_bounds = array<i64: 16, 32>}, {transform_indices = @transform_1, window_bounds = array<i64: 32, 512>}, {transform_indices = @transform_2, window_bounds = array<i64: 1, 512>}, {transform_indices = @transform_3, window_bounds = array<i64: 512, 32>}, {pipeline_mode = #tpu.pipeline_mode<synchronous>, transform_indices = @transform_4, window_bounds = array<i64: 1, 32>}, {transform_indices = @transform_5, window_bounds = array<i64: 16, 32>}]} {
    %c0_i32 = arith.constant 0 : i32
    %0 = arith.cmpi eq, %arg1, %c0_i32 : i32
    %1 = arith.extui %0 : i1 to i32
    %c0_i32_0 = arith.constant 0 : i32
    %2 = arith.cmpi ne, %1, %c0_i32_0 : i32
    scf.if %2 {
      %cst_18 = arith.constant 0.000000e+00 : f32
      %27 = vector.broadcast %cst_18 : f32 to vector<16x32xf32>
      %c0_19 = arith.constant 0 : index
      %c0_20 = arith.constant 0 : index
      %28 = vector.load %arg8[%c0_19, %c0_20] : memref<16x32xf32, #tpu.memory_space<vmem>>, vector<16x32xf32>
      tpu.vector_store %arg8[%c0_19, %c0_20], %27 {strides = array<i32>} : memref<16x32xf32, #tpu.memory_space<vmem>>, vector<16x32xf32>,
    } else {
    }
    %c0 = arith.constant 0 : index
    %c0_1 = arith.constant 0 : index
    %3 = vector.load %arg2[%c0, %c0_1] : memref<16x32xf32, #tpu.memory_space<vmem>>, vector<16x32xf32>
    %4 = arith.truncf %3 : vector<16x32xf32> to vector<16x32xbf16>
    %c0_2 = arith.constant 0 : index
    %c0_3 = arith.constant 0 : index
    %5 = vector.load %arg3[%c0_2, %c0_3] : memref<32x512xbf16, #tpu.memory_space<vmem>>, vector<32x512xbf16>
    %cst = arith.constant dense<0.000000e+00> : vector<16x512xf32>
    %6 = tpu.matmul %4, %5, %cst {dimension_numbers = #tpu.dot_dimension_numbers<[1], [0], [0], [1], [0, 0, 1, 1], [], []>} : vector<16x32xbf16>, vector<32x512xbf16>, vector<16x512xf32> -> vector<16x512xf32>
    %c0_4 = arith.constant 0 : index
    %c0_5 = arith.constant 0 : index
    %7 = vector.load %arg4[%c0_4, %c0_5] : memref<1x512xf32, #tpu.memory_space<vmem>>, vector<1x512xf32>
    %8 = vector.broadcast %7 : vector<1x512xf32> to vector<16x512xf32>
    %9 = arith.addf %6, %8 : vector<16x512xf32>
    %cst_6 = arith.constant 5.000000e-01 : f32
    %10 = vector.broadcast %cst_6 : f32 to vector<16x512xf32>
    %11 = arith.mulf %10, %9 : vector<16x512xf32>
    %cst_7 = arith.constant 0.707106769 : f32
    %12 = vector.broadcast %cst_7 : f32 to vector<16x512xf32>
    %13 = arith.mulf %9, %12 : vector<16x512xf32>
    %14 = math.erf %13 : vector<16x512xf32>
    %cst_8 = arith.constant 1.000000e+00 : f32
    %15 = vector.broadcast %cst_8 : f32 to vector<16x512xf32>
    %16 = arith.addf %15, %14 : vector<16x512xf32>
    %17 = arith.mulf %11, %16 : vector<16x512xf32>
    %c0_9 = arith.constant 0 : index
    %c0_10 = arith.constant 0 : index
    %18 = vector.load %arg8[%c0_9, %c0_10] : memref<16x32xf32, #tpu.memory_space<vmem>>, vector<16x32xf32>
    %19 = arith.truncf %17 : vector<16x512xf32> to vector<16x512xbf16>
    %c0_11 = arith.constant 0 : index
    %c0_12 = arith.constant 0 : index
    %20 = vector.load %arg5[%c0_11, %c0_12] : memref<512x32xbf16, #tpu.memory_space<vmem>>, vector<512x32xbf16>
    %cst_13 = arith.constant dense<0.000000e+00> : vector<16x32xf32>
    %21 = tpu.matmul %19, %20, %cst_13 {dimension_numbers = #tpu.dot_dimension_numbers<[1], [0], [0], [1], [0, 0, 1, 1], [], []>} : vector<16x512xbf16>, vector<512x32xbf16>, vector<16x32xf32> -> vector<16x32xf32>
    %22 = arith.addf %18, %21 : vector<16x32xf32>
    %c0_14 = arith.constant 0 : index
    %c0_15 = arith.constant 0 : index
    %23 = vector.load %arg8[%c0_14, %c0_15] : memref<16x32xf32, #tpu.memory_space<vmem>>, vector<16x32xf32>
    tpu.vector_store %arg8[%c0_14, %c0_15], %22 {strides = array<i32>} : memref<16x32xf32, #tpu.memory_space<vmem>>, vector<16x32xf32>,
    %c0_i32_16 = arith.constant 0 : i32
    %24 = arith.cmpi eq, %arg1, %c0_i32_16 : i32
    %25 = arith.extui %24 : i1 to i32
    %c0_i32_17 = arith.constant 0 : i32
    %26 = arith.cmpi ne, %25, %c0_i32_17 : i32
    scf.if %26 {
      %c0_18 = arith.constant 0 : index
      %c0_19 = arith.constant 0 : index
      %27 = vector.load %arg8[%c0_18, %c0_19] : memref<16x32xf32, #tpu.memory_space<vmem>>, vector<16x32xf32>
      %c0_20 = arith.constant 0 : index
      %c0_21 = arith.constant 0 : index
      %28 = vector.load %arg6[%c0_20, %c0_21] : memref<1x32xf32, #tpu.memory_space<vmem>>, vector<1x32xf32>
      %29 = vector.broadcast %28 : vector<1x32xf32> to vector<16x32xf32>
      %30 = arith.addf %27, %29 : vector<16x32xf32>
      %c0_22 = arith.constant 0 : index
      %c0_23 = arith.constant 0 : index
      %31 = vector.load %arg7[%c0_22, %c0_23] : memref<16x32xf32, #tpu.memory_space<vmem>>, vector<16x32xf32>
      tpu.vector_store %arg7[%c0_22, %c0_23], %30 {strides = array<i32>} : memref<16x32xf32, #tpu.memory_space<vmem>>, vector<16x32xf32>,
    } else {
    }
    return
  }
  func.func @transform_0(%arg0: i32, %arg1: i32) -> (i32, i32) {
    %c0_i32 = arith.constant 0 : i32
    %c0_i32_0 = arith.constant 0 : i32
    return %arg0, %c0_i32 : i32, i32
  }
  func.func @transform_1(%arg0: i32, %arg1: i32) -> (i32, i32) {
    %c0_i32 = arith.constant 0 : i32
    %c0_i32_0 = arith.constant 0 : i32
    return %c0_i32, %arg1 : i32, i32
  }
  func.func @transform_2(%arg0: i32, %arg1: i32) -> (i32, i32) {
    %c0_i32 = arith.constant 0 : i32
    %c0_i32_0 = arith.constant 0 : i32
    return %c0_i32, %arg1 : i32, i32
  }
  func.func @transform_3(%arg0: i32, %arg1: i32) -> (i32, i32) {
    %c0_i32 = arith.constant 0 : i32
    %c0_i32_0 = arith.constant 0 : i32
    return %arg1, %c0_i32 : i32, i32
  }
  func.func @transform_4(%arg0: i32, %arg1: i32) -> (i32, i32) {
    %c0_i32 = arith.constant 0 : i32
    %c0_i32_0 = arith.constant 0 : i32
    %c0_i32_1 = arith.constant 0 : i32
    return %c0_i32, %c0_i32_0 : i32, i32
  }
  func.func @transform_5(%arg0: i32, %arg1: i32) -> (i32, i32) {
    %c0_i32 = arith.constant 0 : i32
    %c0_i32_0 = arith.constant 0 : i32
    return %arg0, %c0_i32 : i32, i32
  }
}

</mosaic_0001>

<llo_original>
// kernel: tpu_custom_call.1
$region0: #{tpu_custom_call.1}
  #allocation0 [shape = 'u32[]', space=smem, size = 0x4, offset = 0x4, fixed_abs, tag = 'smem constant byte address 0x4 - core index']
  #allocation1 [shape = 'u32[72,128]{1,0:T(1,128)}', space=vmem, size = 0x9000, scoped, tag = 'internal scratch']
  #allocation2 [shape = 'f32[16,32]{1,0:T(8,128)}', space=vmem, size = 0x2000, scoped, tag = 'scratch operand']
  %s0 = inlined_call_operand.vmem [shape: f32[16,32], index: 0, kind: input, shape index: {}]
  %s1 = inlined_call_operand.vmem [shape: bf16[32,512], index: 1, kind: input, shape index: {}]
  %s2 = inlined_call_operand.vmem [shape: f32[1,512], index: 2, kind: input, shape index: {}]
  %s3 = inlined_call_operand.vmem [shape: bf16[512,32], index: 3, kind: input, shape index: {}]
  %s4 = inlined_call_operand.vmem [shape: f32[1,32], index: 4, kind: input, shape index: {}]
  %s5 = inlined_call_operand.hbm [shape: f32[16,32], index: 5, kind: output, shape index: {}]
  %s6 = sld [smem:[#allocation0]]
  $region38: #{tpu_custom_call.1} parent=0
    _
  %s8 = ssub.s32 1, %s6
  %s9 = scalar_select 0, %s8, %s6
  $region1: #{tpu_custom_call.1} parent=0
    #allocation3 [shape = 'u8[8192]{0}', space=vmem, size = 0x2000, scoped, tag = 'output window, operand 0, single buffered']
    #allocation4 [shape = 's32[1]{0}', space=sflag, size = 0x4, scoped, tag = 'scoped memory for tpu_custom_call.1']
    %10 = vsyncpa [#allocation4], 0
    // Predicated region
    $region2: #{tpu_custom_call.1} parent=1 // pred_check
      _
    $region3: #{tpu_custom_call.1} parent=1 // pred_check_branch
      %12 = sbr.rel (0) target = $region5
    $region4: #{tpu_custom_call.1} parent=1 // pred_region
      _
    $region5: #{tpu_custom_call.1} parent=1 // pred_fallthru
      _
    // Predicated region
    $region6: #{tpu_custom_call.1} parent=1 // pred_check
      _
    $region7: #{tpu_custom_call.1} parent=1 // pred_check_branch
      %14 = sbr.rel (0) target = $region9
    $region8: #{tpu_custom_call.1} parent=1 // pred_region
      _
    $region9: #{tpu_custom_call.1} parent=1 // pred_fallthru
      _
    // Predicated region
    $region10: #{tpu_custom_call.1} parent=1 // pred_check
      _
    $region11: #{tpu_custom_call.1} parent=1 // pred_check_branch
      %16 = sbr.rel (0) target = $region13
    $region12: #{tpu_custom_call.1} parent=1 // pred_region
      _
    $region13: #{tpu_custom_call.1} parent=1 // pred_fallthru
      _
    // Predicated region
    $region14: #{tpu_custom_call.1} parent=1 // pred_check
      _
    $region15: #{tpu_custom_call.1} parent=1 // pred_check_branch
      %18 = sbr.rel (0) target = $region17
    $region16: #{tpu_custom_call.1} parent=1 // pred_region
      _
    $region17: #{tpu_custom_call.1} parent=1 // pred_fallthru
      _
    // Predicated region
    $region18: #{tpu_custom_call.1} parent=1 // pred_check
      _
    $region19: #{tpu_custom_call.1} parent=1 // pred_check_branch
      %20 = sbr.rel (0) target = $region21
    $region20: #{tpu_custom_call.1} parent=1 // pred_region
      _
    $region21: #{tpu_custom_call.1} parent=1 // pred_fallthru
      _
    %p22 = scmp.eq.s32.totalorder 0, 0
    // Predicated region
    $region22: #{tpu_custom_call.1} parent=1 // pred_check
      %p23 = pneg %p22
    $region23: #{tpu_custom_call.1} parent=1 // pred_check_branch
      %25 = sbr.rel (%p23) target = $region25
    $region24: #{tpu_custom_call.1} parent=1 // pred_region
      %vm26 = vcmask 261120
      %27 = vst.msk [vmem:[#allocation2] sm:$0xff] %vm26, 0.0
      %28 = vst.msk [vmem:[#allocation2 + $0x8] sm:$0xff] %vm26, 0.0
    $region25: #{tpu_custom_call.1} parent=1 // pred_fallthru
      _
    %v29 = vld [vmem:[%s0] sm:$0xff]
    %v30 = vld [vmem:[%s0 + $0x8] sm:$0xff]
    %v31 = vpack.c.bf16 %v30, %v29
    %v32 = vld [vmem:[%s1] sm:$0xff]
    %v33 = vld [vmem:[%s1 + $0x8] sm:$0xff]
    %v34 = vld [vmem:[%s1 + $0x10] sm:$0xff]
    %v35 = vld [vmem:[%s1 + $0x18] sm:$0xff]
    %v36 = vld [vmem:[%s1 + $0x20] sm:$0xff]
    %v37 = vld [vmem:[%s1 + $0x28] sm:$0xff]
    %v38 = vld [vmem:[%s1 + $0x30] sm:$0xff]
    %v39 = vld [vmem:[%s1 + $0x38] sm:$0xff]
    %v40 = vld [vmem:[%s2] sm:$0xf]
    %v42 = vperm.slane %v40, 0
    %v43 = vperm.slane %v40, 1
    %v44 = vperm.slane %v40, 2
    %v45 = vperm.slane %v40, 3
    %v58 = vunpack.c.l.b16 %v32
    %v59 = vunpack.c.h.b16 %v32
    %v60 = vunpack.c.l.b16 %v33
    %v61 = vunpack.c.h.b16 %v33
    %v62 = vunpack.c.l.b16 %v34
    %v63 = vunpack.c.h.b16 %v34
    %v64 = vunpack.c.l.b16 %v35
    %v65 = vunpack.c.h.b16 %v35
    %v66 = vunpack.c.l.b16 %v36
    %v67 = vunpack.c.h.b16 %v36
    %v68 = vunpack.c.l.b16 %v37
    %v69 = vunpack.c.h.b16 %v37
    %v70 = vunpack.c.l.b16 %v38
    %v71 = vunpack.c.h.b16 %v38
    %v72 = vunpack.c.l.b16 %v39
    %v73 = vunpack.c.h.b16 %v39
    %v74 = vpack.c.b16 %v62, %v58
    %v75 = vpack.c.b16 %v63, %v59
    %v76 = vpack.c.b16 %v64, %v60
    %v77 = vpack.c.b16 %v65, %v61
    %v78 = vpack.c.b16 %v70, %v66
    %v79 = vpack.c.b16 %v71, %v67
    %v80 = vpack.c.b16 %v72, %v68
    %v81 = vpack.c.b16 %v73, %v69
    %vm90 = vcmask 261120
    %v92 = vsel %vm90, %v31, 0
    %94 = vmatpush.bf16.msra.mxu0 0
    %95 = vmatpush.bf16.msra.mxu0 0
    %96 = vmatpush.bf16.msra.mxu0 0
    %97 = vmatpush.bf16.msra.mxu0 0
    %98 = vmatpush.bf16.msra.mxu0 0
    %99 = vmatpush.bf16.msra.mxu0 0
    %100 = vmatpush.bf16.msra.mxu0 %v78
    %101 = vmatpush.bf16.msra.mxu0 %v74
    %102 = vmatmul.bf16.gmra.mxu0 %v92
    %v103 = vpop.f32.mrf.mxu0
    %v104 = vadd.f32 %v42, %v103
    %v105 = vpop.f32.mrf.mxu0
    %v106 = vadd.f32 %v42, %v105
    %107 = vdwg.mxu0
    %108 = vmatpush.bf16.msra.mxu0 0
    %109 = vmatpush.bf16.msra.mxu0 0
    %110 = vmatpush.bf16.msra.mxu0 0
    %111 = vmatpush.bf16.msra.mxu0 0
    %112 = vmatpush.bf16.msra.mxu0 0
    %113 = vmatpush.bf16.msra.mxu0 0
    %114 = vmatpush.bf16.msra.mxu0 %v79
    %115 = vmatpush.bf16.msra.mxu0 %v75
    %116 = vmatmul.bf16.gmra.mxu0 %v92
    %v117 = vpop.f32.mrf.mxu0
    %v118 = vadd.f32 %v43, %v117
    %v119 = vpop.f32.mrf.mxu0
    %v120 = vadd.f32 %v43, %v119
    %121 = vdwg.mxu0
    %122 = vmatpush.bf16.msra.mxu0 0
    %123 = vmatpush.bf16.msra.mxu0 0
    %124 = vmatpush.bf16.msra.mxu0 0
    %125 = vmatpush.bf16.msra.mxu0 0
    %126 = vmatpush.bf16.msra.mxu0 0
    %127 = vmatpush.bf16.msra.mxu0 0
    %128 = vmatpush.bf16.msra.mxu0 %v80
    %129 = vmatpush.bf16.msra.mxu0 %v76
    %130 = vmatmul.bf16.gmra.mxu0 %v92
    %v131 = vpop.f32.mrf.mxu0
    %v132 = vadd.f32 %v44, %v131
    %v133 = vpop.f32.mrf.mxu0
    %v134 = vadd.f32 %v44, %v133
    %135 = vdwg.mxu0
    %136 = vmatpush.bf16.msra.mxu0 0
    %137 = vmatpush.bf16.msra.mxu0 0
    %138 = vmatpush.bf16.msra.mxu0 0
    %139 = vmatpush.bf16.msra.mxu0 0
    %140 = vmatpush.bf16.msra.mxu0 0
    %141 = vmatpush.bf16.msra.mxu0 0
    %142 = vmatpush.bf16.msra.mxu0 %v81
    %143 = vmatpush.bf16.msra.mxu0 %v77
    %144 = vmatmul.bf16.gmra.mxu0 %v92
    %v145 = vpop.f32.mrf.mxu0
    %v146 = vadd.f32 %v45, %v145
    %v147 = vpop.f32.mrf.mxu0
    %v148 = vadd.f32 %v45, %v147
    %149 = vdwg.mxu0
    %v150 = vmul.f32 %v104, 0.5
    %v151 = vmul.f32 %v118, 0.5
    %v152 = vmul.f32 %v132, 0.5
    %v153 = vmul.f32 %v146, 0.5
    %v154 = vmul.f32 %v106, 0.5
    %v155 = vmul.f32 %v120, 0.5
    %v156 = vmul.f32 %v134, 0.5
    %v157 = vmul.f32 %v148, 0.5
    %v158 = vmul.f32 %v104, 0.70710677
    %v159 = vmul.f32 %v118, 0.70710677
    %v160 = vmul.f32 %v132, 0.70710677
    %v161 = vmul.f32 %v146, 0.70710677
    %v162 = vmul.f32 %v106, 0.70710677
    %v163 = vmul.f32 %v120, 0.70710677
    %v164 = vmul.f32 %v134, 0.70710677
    %v165 = vmul.f32 %v148, 0.70710677
    %v166 = vmul.f32 %v158, %v158
    %v167 = vmin.f32 16.0, %v166
    %v168 = vmul.f32 %v167, 2.1237322e-06
    %v169 = vadd.f32 %v168, 0.00028619796
    %v170 = vmul.f32 %v167, %v169
    %v171 = vadd.f32 %v170, 0.0036580483
    %v172 = vmul.f32 %v167, %v171
    %v173 = vadd.f32 %v172, 0.05243302
    %v174 = vmul.f32 %v167, %v173
    %v175 = vadd.f32 %v174, 0.18741608
    %v176 = vmul.f32 %v167, %v175
    %v177 = vadd.f32 %v176, 1.1283791
    %v178 = vmul.f32 %v158, %v177
    %v179 = vmul.f32 %v167, 3.8918573e-05
    %v180 = vadd.f32 %v179, 0.001143296
    %v181 = vmul.f32 %v167, %v180
    %v182 = vadd.f32 %v181, 0.014752088
    %v183 = vmul.f32 %v167, %v182
    %v184 = vadd.f32 %v183, 0.112945676
    %v185 = vmul.f32 %v167, %v184
    %v186 = vadd.f32 %v185, 0.4994258
    %v187 = vmul.f32 %v167, %v186
    %v188 = vadd.f32 %v187, 1.0
    %v189 = vrcp.pop %v188
    %v190 = vmul.f32 %v188, %v189
    %v191 = vsub.f32 1.0, %v190
    %v192 = vmul.f32 %v189, %v191
    %v193 = vadd.f32 %v189, %v192
    %vm194 = vweird.f32 %v188
    %vm195 = vweird.f32 %v189
    %vm196 = vmor %vm194, %vm195
    %v197 = vsel %vm196, %v189, %v193
    %v198 = vand.u32 2147483647, %v188
    %vm199 = vcmp.eq.f32.partialorder %v198, 8.507059e+37
    %v200 = vand.u32 %v188, 2147483648
    %v201 = vor.u32 1.1754944e-38, %v200
    %v202 = vsel %vm199, %v201, %v197
    %v203 = vmul.f32 %v178, %v202
    %v204 = vmin.f32 %v203, 1.0
    %v205 = vmax.f32 %v204, -1.0
    %v206 = vmul.f32 %v159, %v159
    %v207 = vmin.f32 16.0, %v206
    %v208 = vmul.f32 %v207, 2.1237322e-06
    %v209 = vadd.f32 %v208, 0.00028619796
    %v210 = vmul.f32 %v207, %v209
    %v211 = vadd.f32 %v210, 0.0036580483
    %v212 = vmul.f32 %v207, %v211
    %v213 = vadd.f32 %v212, 0.05243302
    %v214 = vmul.f32 %v207, %v213
    %v215 = vadd.f32 %v214, 0.18741608
    %v216 = vmul.f32 %v207, %v215
    %v217 = vadd.f32 %v216, 1.1283791
    %v218 = vmul.f32 %v159, %v217
    %v219 = vmul.f32 %v207, 3.8918573e-05
    %v220 = vadd.f32 %v219, 0.001143296
    %v221 = vmul.f32 %v207, %v220
    %v222 = vadd.f32 %v221, 0.014752088
    %v223 = vmul.f32 %v207, %v222
    %v224 = vadd.f32 %v223, 0.112945676
    %v225 = vmul.f32 %v207, %v224
    %v226 = vadd.f32 %v225, 0.4994258
    %v227 = vmul.f32 %v207, %v226
    %v228 = vadd.f32 %v227, 1.0
    %v229 = vrcp.pop %v228
    %v230 = vmul.f32 %v228, %v229
    %v231 = vsub.f32 1.0, %v230
    %v232 = vmul.f32 %v229, %v231
    %v233 = vadd.f32 %v229, %v232
    %vm234 = vweird.f32 %v228
    %vm235 = vweird.f32 %v229
    %vm236 = vmor %vm234, %vm235
    %v237 = vsel %vm236, %v229, %v233
    %v238 = vand.u32 2147483647, %v228
    %vm239 = vcmp.eq.f32.partialorder %v238, 8.507059e+37
    %v240 = vand.u32 %v228, 2147483648
    %v241 = vor.u32 1.1754944e-38, %v240
    %v242 = vsel %vm239, %v241, %v237
    %v243 = vmul.f32 %v218, %v242
    %v244 = vmin.f32 %v243, 1.0
    %v245 = vmax.f32 %v244, -1.0
    %v246 = vmul.f32 %v160, %v160
    %v247 = vmin.f32 16.0, %v246
    %v248 = vmul.f32 %v247, 2.1237322e-06
    %v249 = vadd.f32 %v248, 0.00028619796
    %v250 = vmul.f32 %v247, %v249
    %v251 = vadd.f32 %v250, 0.0036580483
    %v252 = vmul.f32 %v247, %v251
    %v253 = vadd.f32 %v252, 0.05243302
    %v254 = vmul.f32 %v247, %v253
    %v255 = vadd.f32 %v254, 0.18741608
    %v256 = vmul.f32 %v247, %v255
    %v257 = vadd.f32 %v256, 1.1283791
    %v258 = vmul.f32 %v160, %v257
    %v259 = vmul.f32 %v247, 3.8918573e-05
    %v260 = vadd.f32 %v259, 0.001143296
    %v261 = vmul.f32 %v247, %v260
    %v262 = vadd.f32 %v261, 0.014752088
    %v263 = vmul.f32 %v247, %v262
    %v264 = vadd.f32 %v263, 0.112945676
    %v265 = vmul.f32 %v247, %v264
    %v266 = vadd.f32 %v265, 0.4994258
    %v267 = vmul.f32 %v247, %v266
    %v268 = vadd.f32 %v267, 1.0
    %v269 = vrcp.pop %v268
    %v270 = vmul.f32 %v268, %v269
    %v271 = vsub.f32 1.0, %v270
    %v272 = vmul.f32 %v269, %v271
    %v273 = vadd.f32 %v269, %v272
    %vm274 = vweird.f32 %v268
    %vm275 = vweird.f32 %v269
    %vm276 = vmor %vm274, %vm275
    %v277 = vsel %vm276, %v269, %v273
    %v278 = vand.u32 2147483647, %v268
    %vm279 = vcmp.eq.f32.partialorder %v278, 8.507059e+37
    %v280 = vand.u32 %v268, 2147483648
    %v281 = vor.u32 1.1754944e-38, %v280
    %v282 = vsel %vm279, %v281, %v277
    %v283 = vmul.f32 %v258, %v282
    %v284 = vmin.f32 %v283, 1.0
    %v285 = vmax.f32 %v284, -1.0
    %v286 = vmul.f32 %v161, %v161
    %v287 = vmin.f32 16.0, %v286
    %v288 = vmul.f32 %v287, 2.1237322e-06
    %v289 = vadd.f32 %v288, 0.00028619796
    %v290 = vmul.f32 %v287, %v289
    %v291 = vadd.f32 %v290, 0.0036580483
    %v292 = vmul.f32 %v287, %v291
    %v293 = vadd.f32 %v292, 0.05243302
    %v294 = vmul.f32 %v287, %v293
    %v295 = vadd.f32 %v294, 0.18741608
    %v296 = vmul.f32 %v287, %v295
    %v297 = vadd.f32 %v296, 1.1283791
    %v298 = vmul.f32 %v161, %v297
    %v299 = vmul.f32 %v287, 3.8918573e-05
    %v300 = vadd.f32 %v299, 0.001143296
    %v301 = vmul.f32 %v287, %v300
    %v302 = vadd.f32 %v301, 0.014752088
    %v303 = vmul.f32 %v287, %v302
    %v304 = vadd.f32 %v303, 0.112945676
    %v305 = vmul.f32 %v287, %v304
    %v306 = vadd.f32 %v305, 0.4994258
    %v307 = vmul.f32 %v287, %v306
    %v308 = vadd.f32 %v307, 1.0
    %v309 = vrcp.pop %v308
    %v310 = vmul.f32 %v308, %v309
    %v311 = vsub.f32 1.0, %v310
    %v312 = vmul.f32 %v309, %v311
    %v313 = vadd.f32 %v309, %v312
    %vm314 = vweird.f32 %v308
    %vm315 = vweird.f32 %v309
    %vm316 = vmor %vm314, %vm315
    %v317 = vsel %vm316, %v309, %v313
    %v318 = vand.u32 2147483647, %v308
    %vm319 = vcmp.eq.f32.partialorder %v318, 8.507059e+37
    %v320 = vand.u32 %v308, 2147483648
    %v321 = vor.u32 1.1754944e-38, %v320
    %v322 = vsel %vm319, %v321, %v317
    %v323 = vmul.f32 %v298, %v322
    %v324 = vmin.f32 %v323, 1.0
    %v325 = vmax.f32 %v324, -1.0
    %v326 = vmul.f32 %v162, %v162
    %v327 = vmin.f32 16.0, %v326
    %v328 = vmul.f32 %v327, 2.1237322e-06
    %v329 = vadd.f32 %v328, 0.00028619796
    %v330 = vmul.f32 %v327, %v329
    %v331 = vadd.f32 %v330, 0.0036580483
    %v332 = vmul.f32 %v327, %v331
    %v333 = vadd.f32 %v332, 0.05243302
    %v334 = vmul.f32 %v327, %v333
    %v335 = vadd.f32 %v334, 0.18741608
    %v336 = vmul.f32 %v327, %v335
    %v337 = vadd.f32 %v336, 1.1283791
    %v338 = vmul.f32 %v162, %v337
    %v339 = vmul.f32 %v327, 3.8918573e-05
    %v340 = vadd.f32 %v339, 0.001143296
    %v341 = vmul.f32 %v327, %v340
    %v342 = vadd.f32 %v341, 0.014752088
    %v343 = vmul.f32 %v327, %v342
    %v344 = vadd.f32 %v343, 0.112945676
    %v345 = vmul.f32 %v327, %v344
    %v346 = vadd.f32 %v345, 0.4994258
    %v347 = vmul.f32 %v327, %v346
    %v348 = vadd.f32 %v347, 1.0
    %v349 = vrcp.pop %v348
    %v350 = vmul.f32 %v348, %v349
    %v351 = vsub.f32 1.0, %v350
    %v352 = vmul.f32 %v349, %v351
    %v353 = vadd.f32 %v349, %v352
    %vm354 = vweird.f32 %v348
    %vm355 = vweird.f32 %v349
    %vm356 = vmor %vm354, %vm355
    %v357 = vsel %vm356, %v349, %v353
    %v358 = vand.u32 2147483647, %v348
    %vm359 = vcmp.eq.f32.partialorder %v358, 8.507059e+37
    %v360 = vand.u32 %v348, 2147483648
    %v361 = vor.u32 1.1754944e-38, %v360
    %v362 = vsel %vm359, %v361, %v357
    %v363 = vmul.f32 %v338, %v362
    %v364 = vmin.f32 %v363, 1.0
    %v365 = vmax.f32 %v364, -1.0
    %v366 = vmul.f32 %v163, %v163
    %v367 = vmin.f32 16.0, %v366
    %v368 = vmul.f32 %v367, 2.1237322e-06
    %v369 = vadd.f32 %v368, 0.00028619796
    %v370 = vmul.f32 %v367, %v369
    %v371 = vadd.f32 %v370, 0.0036580483
    %v372 = vmul.f32 %v367, %v371
    %v373 = vadd.f32 %v372, 0.05243302
    %v374 = vmul.f32 %v367, %v373
    %v375 = vadd.f32 %v374, 0.18741608
    %v376 = vmul.f32 %v367, %v375
    %v377 = vadd.f32 %v376, 1.1283791
    %v378 = vmul.f32 %v163, %v377
    %v379 = vmul.f32 %v367, 3.8918573e-05
    %v380 = vadd.f32 %v379, 0.001143296
    %v381 = vmul.f32 %v367, %v380
    %v382 = vadd.f32 %v381, 0.014752088
    %v383 = vmul.f32 %v367, %v382
    %v384 = vadd.f32 %v383, 0.112945676
    %v385 = vmul.f32 %v367, %v384
    %v386 = vadd.f32 %v385, 0.4994258
    %v387 = vmul.f32 %v367, %v386
    %v388 = vadd.f32 %v387, 1.0
    %v389 = vrcp.pop %v388
    %v390 = vmul.f32 %v388, %v389
    %v391 = vsub.f32 1.0, %v390
    %v392 = vmul.f32 %v389, %v391
    %v393 = vadd.f32 %v389, %v392
    %vm394 = vweird.f32 %v388
    %vm395 = vweird.f32 %v389
    %vm396 = vmor %vm394, %vm395
    %v397 = vsel %vm396, %v389, %v393
    %v398 = vand.u32 2147483647, %v388
    %vm399 = vcmp.eq.f32.partialorder %v398, 8.507059e+37
    %v400 = vand.u32 %v388, 2147483648
    %v401 = vor.u32 1.1754944e-38, %v400
    %v402 = vsel %vm399, %v401, %v397
    %v403 = vmul.f32 %v378, %v402
    %v404 = vmin.f32 %v403, 1.0
    %v405 = vmax.f32 %v404, -1.0
    %v406 = vmul.f32 %v164, %v164
    %v407 = vmin.f32 16.0, %v406
    %v408 = vmul.f32 %v407, 2.1237322e-06
    %v409 = vadd.f32 %v408, 0.00028619796
    %v410 = vmul.f32 %v407, %v409
    %v411 = vadd.f32 %v410, 0.0036580483
    %v412 = vmul.f32 %v407, %v411
    %v413 = vadd.f32 %v412, 0.05243302
    %v414 = vmul.f32 %v407, %v413
    %v415 = vadd.f32 %v414, 0.18741608
    %v416 = vmul.f32 %v407, %v415
    %v417 = vadd.f32 %v416, 1.1283791
    %v418 = vmul.f32 %v164, %v417
    %v419 = vmul.f32 %v407, 3.8918573e-05
    %v420 = vadd.f32 %v419, 0.001143296
    %v421 = vmul.f32 %v407, %v420
    %v422 = vadd.f32 %v421, 0.014752088
    %v423 = vmul.f32 %v407, %v422
    %v424 = vadd.f32 %v423, 0.112945676
    %v425 = vmul.f32 %v407, %v424
    %v426 = vadd.f32 %v425, 0.4994258
    %v427 = vmul.f32 %v407, %v426
    %v428 = vadd.f32 %v427, 1.0
    %v429 = vrcp.pop %v428
    %v430 = vmul.f32 %v428, %v429
    %v431 = vsub.f32 1.0, %v430
    %v432 = vmul.f32 %v429, %v431
    %v433 = vadd.f32 %v429, %v432
    %vm434 = vweird.f32 %v428
    %vm435 = vweird.f32 %v429
    %vm436 = vmor %vm434, %vm435
    %v437 = vsel %vm436, %v429, %v433
    %v438 = vand.u32 2147483647, %v428
    %vm439 = vcmp.eq.f32.partialorder %v438, 8.507059e+37
    %v440 = vand.u32 %v428, 2147483648
    %v441 = vor.u32 1.1754944e-38, %v440
    %v442 = vsel %vm439, %v441, %v437
    %v443 = vmul.f32 %v418, %v442
    %v444 = vmin.f32 %v443, 1.0
    %v445 = vmax.f32 %v444, -1.0
    %v446 = vmul.f32 %v165, %v165
    %v447 = vmin.f32 16.0, %v446
    %v448 = vmul.f32 %v447, 2.1237322e-06
    %v449 = vadd.f32 %v448, 0.00028619796
    %v450 = vmul.f32 %v447, %v449
    %v451 = vadd.f32 %v450, 0.0036580483
    %v452 = vmul.f32 %v447, %v451
    %v453 = vadd.f32 %v452, 0.05243302
    %v454 = vmul.f32 %v447, %v453
    %v455 = vadd.f32 %v454, 0.18741608
    %v456 = vmul.f32 %v447, %v455
    %v457 = vadd.f32 %v456, 1.1283791
    %v458 = vmul.f32 %v165, %v457
    %v459 = vmul.f32 %v447, 3.8918573e-05
    %v460 = vadd.f32 %v459, 0.001143296
    %v461 = vmul.f32 %v447, %v460
    %v462 = vadd.f32 %v461, 0.014752088
    %v463 = vmul.f32 %v447, %v462
    %v464 = vadd.f32 %v463, 0.112945676
    %v465 = vmul.f32 %v447, %v464
    %v466 = vadd.f32 %v465, 0.4994258
    %v467 = vmul.f32 %v447, %v466
    %v468 = vadd.f32 %v467, 1.0
    %v469 = vrcp.pop %v468
    %v470 = vmul.f32 %v468, %v469
    %v471 = vsub.f32 1.0, %v470
    %v472 = vmul.f32 %v469, %v471
    %v473 = vadd.f32 %v469, %v472
    %vm474 = vweird.f32 %v468
    %vm475 = vweird.f32 %v469
    %vm476 = vmor %vm474, %vm475
    %v477 = vsel %vm476, %v469, %v473
    %v478 = vand.u32 2147483647, %v468
    %vm479 = vcmp.eq.f32.partialorder %v478, 8.507059e+37
    %v480 = vand.u32 %v468, 2147483648
    %v481 = vor.u32 1.1754944e-38, %v480
    %v482 = vsel %vm479, %v481, %v477
    %v483 = vmul.f32 %v458, %v482
    %v484 = vmin.f32 %v483, 1.0
    %v485 = vmax.f32 %v484, -1.0
    %v486 = vadd.f32 %v205, 1.0
    %v487 = vadd.f32 %v245, 1.0
    %v488 = vadd.f32 %v285, 1.0
    %v489 = vadd.f32 %v325, 1.0
    %v490 = vadd.f32 %v365, 1.0
    %v491 = vadd.f32 %v405, 1.0
    %v492 = vadd.f32 %v445, 1.0
    %v493 = vadd.f32 %v485, 1.0
    %v494 = vmul.f32 %v150, %v486
    %v495 = vmul.f32 %v151, %v487
    %v496 = vmul.f32 %v152, %v488
    %v497 = vmul.f32 %v153, %v489
    %v498 = vmul.f32 %v154, %v490
    %v499 = vmul.f32 %v155, %v491
    %v500 = vmul.f32 %v156, %v492
    %v501 = vmul.f32 %v157, %v493
    %v502 = vld [vmem:[#allocation2] sm:$0xff]
    %v503 = vld [vmem:[#allocation2 + $0x8] sm:$0xff]
    %v504 = vpack.c.bf16 %v498, %v494
    %v505 = vpack.c.bf16 %v499, %v495
    %v506 = vpack.c.bf16 %v500, %v496
    %v507 = vpack.c.bf16 %v501, %v497
    %v508 = vld [vmem:[%s3] sm:$0xf]
    %v509 = vld [vmem:[%s3 + $0x4] sm:$0xf]
    %v510 = vld [vmem:[%s3 + $0x8] sm:$0xf]
    %v511 = vld [vmem:[%s3 + $0xc] sm:$0xf]
    %v512 = vld [vmem:[%s3 + $0x10] sm:$0xf]
    %v513 = vld [vmem:[%s3 + $0x14] sm:$0xf]
    %v514 = vld [vmem:[%s3 + $0x18] sm:$0xf]
    %v515 = vld [vmem:[%s3 + $0x1c] sm:$0xf]
    %v516 = vld [vmem:[%s3 + $0x20] sm:$0xf]
    %v517 = vld [vmem:[%s3 + $0x24] sm:$0xf]
    %v518 = vld [vmem:[%s3 + $0x28] sm:$0xf]
    %v519 = vld [vmem:[%s3 + $0x2c] sm:$0xf]
    %v520 = vld [vmem:[%s3 + $0x30] sm:$0xf]
    %v521 = vld [vmem:[%s3 + $0x34] sm:$0xf]
    %v522 = vld [vmem:[%s3 + $0x38] sm:$0xf]
    %v523 = vld [vmem:[%s3 + $0x3c] sm:$0xf]
    %v524 = vld [vmem:[%s3 + $0x40] sm:$0xf]
    %v525 = vld [vmem:[%s3 + $0x44] sm:$0xf]
    %v526 = vld [vmem:[%s3 + $0x48] sm:$0xf]
    %v527 = vld [vmem:[%s3 + $0x4c] sm:$0xf]
    %v528 = vld [vmem:[%s3 + $0x50] sm:$0xf]
    %v529 = vld [vmem:[%s3 + $0x54] sm:$0xf]
    %v530 = vld [vmem:[%s3 + $0x58] sm:$0xf]
    %v531 = vld [vmem:[%s3 + $0x5c] sm:$0xf]
    %v532 = vld [vmem:[%s3 + $0x60] sm:$0xf]
    %v533 = vld [vmem:[%s3 + $0x64] sm:$0xf]
    %v534 = vld [vmem:[%s3 + $0x68] sm:$0xf]
    %v535 = vld [vmem:[%s3 + $0x6c] sm:$0xf]
    %v536 = vld [vmem:[%s3 + $0x70] sm:$0xf]
    %v537 = vld [vmem:[%s3 + $0x74] sm:$0xf]
    %v538 = vld [vmem:[%s3 + $0x78] sm:$0xf]
    %v539 = vld [vmem:[%s3 + $0x7c] sm:$0xf]
    %v540 = vld [vmem:[%s3 + $0x80] sm:$0xf]
    %v541 = vld [vmem:[%s3 + $0x84] sm:$0xf]
    %v542 = vld [vmem:[%s3 + $0x88] sm:$0xf]
    %v543 = vld [vmem:[%s3 + $0x8c] sm:$0xf]
    %v544 = vld [vmem:[%s3 + $0x90] sm:$0xf]
    %v545 = vld [vmem:[%s3 + $0x94] sm:$0xf]
    %v546 = vld [vmem:[%s3 + $0x98] sm:$0xf]
    %v547 = vld [vmem:[%s3 + $0x9c] sm:$0xf]
    %v548 = vld [vmem:[%s3 + $0xa0] sm:$0xf]
    %v549 = vld [vmem:[%s3 + $0xa4] sm:$0xf]
    %v550 = vld [vmem:[%s3 + $0xa8] sm:$0xf]
    %v551 = vld [vmem:[%s3 + $0xac] sm:$0xf]
    %v552 = vld [vmem:[%s3 + $0xb0] sm:$0xf]
    %v553 = vld [vmem:[%s3 + $0xb4] sm:$0xf]
    %v554 = vld [vmem:[%s3 + $0xb8] sm:$0xf]
    %v555 = vld [vmem:[%s3 + $0xbc] sm:$0xf]
    %v556 = vld [vmem:[%s3 + $0xc0] sm:$0xf]
    %v557 = vld [vmem:[%s3 + $0xc4] sm:$0xf]
    %v558 = vld [vmem:[%s3 + $0xc8] sm:$0xf]
    %v559 = vld [vmem:[%s3 + $0xcc] sm:$0xf]
    %v560 = vld [vmem:[%s3 + $0xd0] sm:$0xf]
    %v561 = vld [vmem:[%s3 + $0xd4] sm:$0xf]
    %v562 = vld [vmem:[%s3 + $0xd8] sm:$0xf]
    %v563 = vld [vmem:[%s3 + $0xdc] sm:$0xf]
    %v564 = vld [vmem:[%s3 + $0xe0] sm:$0xf]
    %v565 = vld [vmem:[%s3 + $0xe4] sm:$0xf]
    %v566 = vld [vmem:[%s3 + $0xe8] sm:$0xf]
    %v567 = vld [vmem:[%s3 + $0xec] sm:$0xf]
    %v568 = vld [vmem:[%s3 + $0xf0] sm:$0xf]
    %v569 = vld [vmem:[%s3 + $0xf4] sm:$0xf]
    %v570 = vld [vmem:[%s3 + $0xf8] sm:$0xf]
    %v571 = vld [vmem:[%s3 + $0xfc] sm:$0xf]
    %v636 = vunpack.c.l.b16 %v508
    %v637 = vunpack.c.l.b16 %v509
    %v638 = vunpack.c.l.b16 %v510
    %v639 = vunpack.c.l.b16 %v511
    %v640 = vunpack.c.l.b16 %v512
    %v641 = vunpack.c.l.b16 %v513
    %v642 = vunpack.c.l.b16 %v514
    %v643 = vunpack.c.l.b16 %v515
    %v644 = vunpack.c.l.b16 %v516
    %v645 = vunpack.c.l.b16 %v517
    %v646 = vunpack.c.l.b16 %v518
    %v647 = vunpack.c.l.b16 %v519
    %v648 = vunpack.c.l.b16 %v520
    %v649 = vunpack.c.l.b16 %v521
    %v650 = vunpack.c.l.b16 %v522
    %v651 = vunpack.c.l.b16 %v523
    %v652 = vunpack.c.l.b16 %v524
    %v653 = vunpack.c.l.b16 %v525
    %v654 = vunpack.c.l.b16 %v526
    %v655 = vunpack.c.l.b16 %v527
    %v656 = vunpack.c.l.b16 %v528
    %v657 = vunpack.c.l.b16 %v529
    %v658 = vunpack.c.l.b16 %v530
    %v659 = vunpack.c.l.b16 %v531
    %v660 = vunpack.c.l.b16 %v532
    %v661 = vunpack.c.l.b16 %v533
    %v662 = vunpack.c.l.b16 %v534
    %v663 = vunpack.c.l.b16 %v535
    %v664 = vunpack.c.l.b16 %v536
    %v665 = vunpack.c.l.b16 %v537
    %v666 = vunpack.c.l.b16 %v538
    %v667 = vunpack.c.l.b16 %v539
    %v668 = vunpack.c.l.b16 %v540
    %v669 = vunpack.c.l.b16 %v541
    %v670 = vunpack.c.l.b16 %v542
    %v671 = vunpack.c.l.b16 %v543
    %v672 = vunpack.c.l.b16 %v544
    %v673 = vunpack.c.l.b16 %v545
    %v674 = vunpack.c.l.b16 %v546
    %v675 = vunpack.c.l.b16 %v547
    %v676 = vunpack.c.l.b16 %v548
    %v677 = vunpack.c.l.b16 %v549
    %v678 = vunpack.c.l.b16 %v550
    %v679 = vunpack.c.l.b16 %v551
    %v680 = vunpack.c.l.b16 %v552
    %v681 = vunpack.c.l.b16 %v553
    %v682 = vunpack.c.l.b16 %v554
    %v683 = vunpack.c.l.b16 %v555
    %v684 = vunpack.c.l.b16 %v556
    %v685 = vunpack.c.l.b16 %v557
    %v686 = vunpack.c.l.b16 %v558
    %v687 = vunpack.c.l.b16 %v559
    %v688 = vunpack.c.l.b16 %v560
    %v689 = vunpack.c.l.b16 %v561
    %v690 = vunpack.c.l.b16 %v562
    %v691 = vunpack.c.l.b16 %v563
    %v692 = vunpack.c.l.b16 %v564
    %v693 = vunpack.c.l.b16 %v565
    %v694 = vunpack.c.l.b16 %v566
    %v695 = vunpack.c.l.b16 %v567
    %v696 = vunpack.c.l.b16 %v568
    %v697 = vunpack.c.l.b16 %v569
    %v698 = vunpack.c.l.b16 %v570
    %v699 = vunpack.c.l.b16 %v571
    %v700 = vpack.c.b16 %v637, %v636
    %v701 = vpack.c.b16 %v639, %v638
    %v702 = vpack.c.b16 %v641, %v640
    %v703 = vpack.c.b16 %v643, %v642
    %v704 = vpack.c.b16 %v645, %v644
    %v705 = vpack.c.b16 %v647, %v646
    %v706 = vpack.c.b16 %v649, %v648
    %v707 = vpack.c.b16 %v651, %v650
    %v708 = vpack.c.b16 %v653, %v652
    %v709 = vpack.c.b16 %v655, %v654
    %v710 = vpack.c.b16 %v657, %v656
    %v711 = vpack.c.b16 %v659, %v658
    %v712 = vpack.c.b16 %v661, %v660
    %v713 = vpack.c.b16 %v663, %v662
    %v714 = vpack.c.b16 %v665, %v664
    %v715 = vpack.c.b16 %v667, %v666
    %v716 = vpack.c.b16 %v669, %v668
    %v717 = vpack.c.b16 %v671, %v670
    %v718 = vpack.c.b16 %v673, %v672
    %v719 = vpack.c.b16 %v675, %v674
    %v720 = vpack.c.b16 %v677, %v676
    %v721 = vpack.c.b16 %v679, %v678
    %v722 = vpack.c.b16 %v681, %v680
    %v723 = vpack.c.b16 %v683, %v682
    %v724 = vpack.c.b16 %v685, %v684
    %v725 = vpack.c.b16 %v687, %v686
    %v726 = vpack.c.b16 %v689, %v688
    %v727 = vpack.c.b16 %v691, %v690
    %v728 = vpack.c.b16 %v693, %v692
    %v729 = vpack.c.b16 %v695, %v694
    %v730 = vpack.c.b16 %v697, %v696
    %v731 = vpack.c.b16 %v699, %v698
    %764 = vmatpush.bf16.msra.mxu0 %v707
    %765 = vmatpush.bf16.msra.mxu0 %v706
    %766 = vmatpush.bf16.msra.mxu0 %v705
    %767 = vmatpush.bf16.msra.mxu0 %v704
    %768 = vmatpush.bf16.msra.mxu0 %v703
    %769 = vmatpush.bf16.msra.mxu0 %v702
    %770 = vmatpush.bf16.msra.mxu0 %v701
    %771 = vmatpush.bf16.msra.mxu0 %v700
    %772 = vmatmul.bf16.gmra.mxu0 %v504
    %v773 = vpop.f32.mrf.mxu0
    %v774 = vadd.f32 0.0, %v773
    %v775 = vpop.f32.mrf.mxu0
    %v776 = vadd.f32 0.0, %v775
    %777 = vdwg.mxu0
    %778 = vmatpush.bf16.msra.mxu0 %v715
    %779 = vmatpush.bf16.msra.mxu0 %v714
    %780 = vmatpush.bf16.msra.mxu0 %v713
    %781 = vmatpush.bf16.msra.mxu0 %v712
    %782 = vmatpush.bf16.msra.mxu0 %v711
    %783 = vmatpush.bf16.msra.mxu0 %v710
    %784 = vmatpush.bf16.msra.mxu0 %v709
    %785 = vmatpush.bf16.msra.mxu0 %v708
    %786 = vmatmul.bf16.gmra.mxu0 %v505
    %v787 = vpop.f32.mrf.mxu0
    %v788 = vadd.f32 %v774, %v787
    %v789 = vpop.f32.mrf.mxu0
    %v790 = vadd.f32 %v776, %v789
    %791 = vdwg.mxu0
    %792 = vmatpush.bf16.msra.mxu0 %v723
    %793 = vmatpush.bf16.msra.mxu0 %v722
    %794 = vmatpush.bf16.msra.mxu0 %v721
    %795 = vmatpush.bf16.msra.mxu0 %v720
    %796 = vmatpush.bf16.msra.mxu0 %v719
    %797 = vmatpush.bf16.msra.mxu0 %v718
    %798 = vmatpush.bf16.msra.mxu0 %v717
    %799 = vmatpush.bf16.msra.mxu0 %v716
    %800 = vmatmul.bf16.gmra.mxu0 %v506
    %v801 = vpop.f32.mrf.mxu0
    %v802 = vadd.f32 %v788, %v801
    %v803 = vpop.f32.mrf.mxu0
    %v804 = vadd.f32 %v790, %v803
    %805 = vdwg.mxu0
    %806 = vmatpush.bf16.msra.mxu0 %v731
    %807 = vmatpush.bf16.msra.mxu0 %v730
    %808 = vmatpush.bf16.msra.mxu0 %v729
    %809 = vmatpush.bf16.msra.mxu0 %v728
    %810 = vmatpush.bf16.msra.mxu0 %v727
    %811 = vmatpush.bf16.msra.mxu0 %v726
    %812 = vmatpush.bf16.msra.mxu0 %v725
    %813 = vmatpush.bf16.msra.mxu0 %v724
    %814 = vmatmul.bf16.gmra.mxu0 %v507
    %v815 = vpop.f32.mrf.mxu0
    %v816 = vadd.f32 %v802, %v815
    %v817 = vpop.f32.mrf.mxu0
    %v818 = vadd.f32 %v804, %v817
    %819 = vdwg.mxu0
    %v820 = vadd.f32 %v502, %v816
    %v821 = vadd.f32 %v503, %v818
    %822 = vst.msk [vmem:[#allocation2] sm:$0xff] %vm90, %v820
    %823 = vst.msk [vmem:[#allocation2 + $0x8] sm:$0xff] %vm90, %v821
    // Predicated region
    $region26: #{tpu_custom_call.1} parent=1 // pred_check
      %p824 = pneg %p22
    $region27: #{tpu_custom_call.1} parent=1 // pred_check_branch
      %826 = sbr.rel (%p824) target = $region29
    $region28: #{tpu_custom_call.1} parent=1 // pred_region
      %v827 = vld [vmem:[#allocation2] sm:$0xff]
      %v828 = vld [vmem:[#allocation2 + $0x8] sm:$0xff]
      %v829 = vld [vmem:[%s4] sm:$0x1]
      %v831 = vperm.slane %v829, 0
      %v833 = vadd.f32 %v827, %v831
      %v834 = vadd.f32 %v828, %v831
      %835 = vst.msk [vmem:[#allocation3] sm:$0xff] %vm90, %v833
      %836 = vst.msk [vmem:[#allocation3 + $0x8] sm:$0xff] %vm90, %v834
    $region29: #{tpu_custom_call.1} parent=1 // pred_fallthru
      _
    // Predicated region
    $region30: #{tpu_custom_call.1} parent=1 // pred_check
      _
    $region31: #{tpu_custom_call.1} parent=1 // pred_check_branch
      %838 = sbr.rel (0) target = $region33
    $region32: #{tpu_custom_call.1} parent=1 // pred_region
      %840 = vsyncadd [#allocation4], 0
      %s841 = sshll.u32 [#allocation3], 4
      %s842 = int_to_ptr.vmem [resolvable:$true] %s841
      %s843 = sshll.u32 %s5, 4
      %s844 = int_to_ptr.hbm [resolvable:$true] %s843
      %849 = dma.vmem_to_hbm [thread:$0]  %s842, 256, %s844, [#allocation4], 128, 128, 8
    $region33: #{tpu_custom_call.1} parent=1 // pred_fallthru
      _
    // Predicated region
    $region34: #{tpu_custom_call.1} parent=1 // pred_check
      _
    $region35: #{tpu_custom_call.1} parent=1 // pred_check_branch
      %851 = sbr.rel (0) target = $region37
    $region36: #{tpu_custom_call.1} parent=1 // pred_region
      %853 = dma.done [#allocation4], 256
    $region37: #{tpu_custom_call.1} parent=1 // pred_fallthru
      _
    %854 = vsyncpa [#allocation4], 1

</llo_original>
